<compile_context>
chip_gen: v5e
topology: v5e:2x2
jax: 0.10.0
libtpu: 0.0.40
codegen_flags: <defaults>
</compile_context>

<pallas_src>
import math

import numpy as np
import jax
import jax.numpy as jnp
from jax.experimental import pallas as pl
from jax.experimental.pallas import tpu as pltpu

_LANES = 128
_SUBLANES = 8
_VMEM_BUDGET = 20 * 1024 * 1024      # target bytes for all double-buffered windows
_MAX_ONEHOT_BYTES = 4 * 1024 * 1024  # cap on the lane-packing constant


def _round_up(a, b):
    return ((a + b - 1) // b) * b


# ----------------------------------------------------------------------------- kernels
def _sinpos_kernel_g1(x_ref, tab_ref, out_ref):
    """group == 1 path.  x_ref: (TR, 1); tab_ref: (2, W); out_ref: (TR, W)."""
    x = x_ref[...]                               # (TR, 1) broadcasts over lanes
    freq = tab_ref[0:1, :]                       # (1, W)
    phase = tab_ref[1:2, :]                      # (1, W)
    out_ref[...] = jnp.sin(x * freq + phase).astype(out_ref.dtype)


def _sinpos_kernel_packed(x_ref, tab_ref, oneh_ref, out_ref):
    """group > 1 path.  x_ref: (TR, G); oneh_ref: (G, W); tab_ref: (2, W)."""
    # Lane expansion on the (idle) MXU: xw[:, g*dim + d] = x[:, g]
    xw = jnp.dot(x_ref[...], oneh_ref[...], preferred_element_type=jnp.float32)
    freq = tab_ref[0:1, :]
    phase = tab_ref[1:2, :]
    out_ref[...] = jnp.sin(xw * freq + phase).astype(out_ref.dtype)


# ----------------------------------------------------------------------------- tables
def _freq_phase(dim):
    odd = dim % 2
    half_sin = dim // 2 + 1 if odd else dim // 2
    emb = math.log(10000.0) / half_sin
    d = np.arange(dim)
    idx = np.where(d < half_sin, d, d - half_sin).astype(np.float32)
    freq = np.exp(idx * -np.float32(emb)).astype(np.float32)
    phase = np.where(d < half_sin, np.float32(0.0),
                     np.float32(math.pi / 2.0)).astype(np.float32)
    return freq, phase


def _reference(x, dim):
    """Pure-JAX reference mirroring the PyTorch forward exactly."""
    odd = dim % 2
    half = dim // 2 + 1 if odd else dim // 2
    emb = math.log(10000.0) / half
    sin_f = jnp.exp(jnp.arange(half, dtype=jnp.float32) * -emb)
    hc = half - 1 if odd else half
    cos_f = jnp.exp(jnp.arange(hc, dtype=jnp.float32) * -emb)
    xe = x.astype(jnp.float32)[..., None]
    return jnp.concatenate([jnp.sin(xe * sin_f), jnp.cos(xe * cos_f)], axis=-1)


# ----------------------------------------------------------------------------- wrapper
def sinusoidal_pos_emb(x, dim, *, block_rows=None, out_dtype=jnp.float32,
                       force_pallas=False):
    """Pallas port of SinusoidalPosEmb.forward: x (any shape) -> x.shape + (dim,)."""
    orig_shape = x.shape
    x_flat = jnp.reshape(x, (-1,)).astype(jnp.float32)
    m = int(x_flat.shape[0])

    # Tiny inputs (typical diffusion-timestep case): launch overhead dominates.
    if not force_pallas and m < 1024:
        return _reference(x, dim).astype(out_dtype)

    # --- lane packing: width = lcm(dim, 128) -> always a multiple of 128 -------------
    group = _LANES // math.gcd(dim, _LANES)
    width = group * dim
    if group > 1 and group * width * 4 > _MAX_ONEHOT_BYTES:
        group, width = 1, dim                    # huge odd dims: accept masked tail

    rows = pl.cdiv(m, group)
    rows_pad = _round_up(rows, _SUBLANES)        # pad < 8 packed rows (< 8*group scalars)
    m_pad = rows_pad * group

    freq, phase = _freq_phase(dim)
    table = jnp.asarray(np.stack([np.tile(freq, group), np.tile(phase, group)]))  # (2, W)

    # --- VMEM-budgeted tile size ------------------------------------------------------
    bytes_out = np.dtype(out_dtype).itemsize
    per_row_bytes = _LANES * 4 + width * bytes_out          # x window lane-pads to 128
    const_bytes = _SUBLANES * width * 4                     # (2, W) table (8-sublane pad)
    if group > 1:
        const_bytes += _round_up(group, _SUBLANES) * width * 4   # one-hot constant
    max_rows_vmem = max(_SUBLANES, (_VMEM_BUDGET // 2 - const_bytes) // per_row_bytes)

    if block_rows is None:
        block_rows = min(max_rows_vmem, 8192)
        # keep >= ~4 grid steps when there's enough work (v7x two-TC sharding)
        block_rows = min(block_rows,
                         max(_SUBLANES, _round_up(pl.cdiv(rows_pad, 4), _SUBLANES)))
    block_rows = min(block_rows, rows_pad)
    block_rows = max(_SUBLANES, (block_rows // _SUBLANES) * _SUBLANES)

    if m_pad != m:
        x_flat = jnp.pad(x_flat, (0, m_pad - m))
    x_packed = x_flat.reshape(rows_pad, group)

    grid = (pl.cdiv(rows_pad, block_rows),)      # ragged last block handled by Pallas

    in_specs = [pl.BlockSpec((block_rows, group), lambda i: (i, 0)),
                pl.BlockSpec((2, width), lambda i: (0, 0))]
    args = [x_packed, table]
    if group > 1:
        onehot = jnp.asarray(np.kron(np.eye(group, dtype=np.float32),
                                     np.ones((1, dim), dtype=np.float32)))  # (G, W)
        in_specs.append(pl.BlockSpec((group, width), lambda i: (0, 0)))
        args.append(onehot)
        kernel = _sinpos_kernel_packed
    else:
        kernel = _sinpos_kernel_g1

    needed = 2 * (block_rows * per_row_bytes + const_bytes)
    vmem_limit = int(min(56 * 1024 * 1024,
                         max(32 * 1024 * 1024, needed + 8 * 1024 * 1024)))

    cost = pl.CostEstimate(
        flops=int(2 * rows_pad * width * (group + 1)),
        transcendentals=int(rows_pad * width),
        bytes_accessed=int(m_pad * 4 + rows_pad * width * bytes_out + const_bytes),
    )

    out_packed = pl.pallas_call(
        kernel,
        out_shape=jax.ShapeDtypeStruct((rows_pad, width), out_dtype),
        grid=grid,
        in_specs=in_specs,
        out_specs=pl.BlockSpec((block_rows, width), lambda i: (i, 0)),
        compiler_params=pltpu.CompilerParams(
            dimension_semantics=("parallel",),
            vmem_limit_bytes=vmem_limit),
        cost_estimate=cost,
    )(*args)

    out = out_packed.reshape(m_pad, dim)
    if m_pad != m:
        out = out[:m]
    return out.reshape(orig_shape + (dim,))


# ----------------------------------------------------------------------------- tests
if __name__ == "__main__":
    dim = 32

    # Batched "timestep"-style input: (batch=2, seq=8) -> packed path (G=4, W=128).
    x = jax.random.uniform(jax.random.PRNGKey(0), (2, 8), dtype=jnp.float32) * 100.0
    out = jax.block_until_ready(sinusoidal_pos_emb(x, dim, force_pallas=True))
    ref = _reference(x, dim)
    assert out.shape == (2, 8, dim), out.shape
    assert jnp.allclose(out, ref, atol=1e-4, rtol=1e-4), "mismatch vs reference"

    # 1-D input, odd dim -> lcm packing (G=128, W=4224), MXU lane expansion.
    x1 = jax.random.uniform(jax.random.PRNGKey(1), (8,), dtype=jnp.float32) * 50.0
    out1 = jax.block_until_ready(sinusoidal_pos_emb(x1, 33, force_pallas=True))
    ref1 = _reference(x1, 33)
    assert out1.shape == (8, 33), out1.shape
    assert jnp.allclose(out1, ref1, atol=1e-4, rtol=1e-4), "mismatch (odd dim)"

    # Small block_rows to exercise a multi-step grid (grid=(2,), packed path).
    x2 = jax.random.uniform(jax.random.PRNGKey(2), (4, 16), dtype=jnp.float32) * 10.0
    out2 = jax.block_until_ready(
        sinusoidal_pos_emb(x2, dim, block_rows=8, force_pallas=True))
    ref2 = _reference(x2, dim)
    assert out2.shape == (4, 16, dim), out2.shape
    assert jnp.allclose(out2, ref2, atol=1e-4, rtol=1e-4), "mismatch (gridded)"

    # Ragged last block: 96 positions -> 24 packed rows, block_rows=16 -> grid=(2,).
    x3 = jax.random.uniform(jax.random.PRNGKey(3), (96,), dtype=jnp.float32) * 20.0
    out3 = jax.block_until_ready(
        sinusoidal_pos_emb(x3, dim, block_rows=16, force_pallas=True))
    ref3 = _reference(x3, dim)
    assert out3.shape == (96, dim), out3.shape
    assert jnp.allclose(out3, ref3, atol=1e-4, rtol=1e-4), "mismatch (ragged)"

    print("KERNEL_OK")
</pallas_src>

<mosaic_0001>
module attributes {stable_mosaic.version = 11 : i64} {
  func.func @_sinpos_kernel_packed(%arg0: i32, %arg1: memref<8x4xf32, #tpu.memory_space<vmem>>, %arg2: memref<2x128xf32, #tpu.memory_space<vmem>>, %arg3: memref<4x128xf32, #tpu.memory_space<vmem>>, %arg4: memref<8x128xf32, #tpu.memory_space<vmem>>) attributes {dimension_semantics = [#tpu.dimension_semantics<parallel>], iteration_bounds = array<i64: 1>, scalar_prefetch = 0 : i64, scratch_operands = 0 : i64, tpu.core_type = #tpu.core_type<tc>, window_params = [{transform_indices = @transform_0, window_bounds = array<i64: 8, 4>}, {pipeline_mode = #tpu.pipeline_mode<synchronous>, transform_indices = @transform_1, window_bounds = array<i64: 2, 128>}, {pipeline_mode = #tpu.pipeline_mode<synchronous>, transform_indices = @transform_2, window_bounds = array<i64: 4, 128>}, {transform_indices = @transform_3, window_bounds = array<i64: 8, 128>}]} {
    %c0 = arith.constant 0 : index
    %c0_0 = arith.constant 0 : index
    %0 = vector.load %arg1[%c0, %c0_0] : memref<8x4xf32, #tpu.memory_space<vmem>>, vector<8x4xf32>
    %c0_1 = arith.constant 0 : index
    %c0_2 = arith.constant 0 : index
    %1 = vector.load %arg3[%c0_1, %c0_2] : memref<4x128xf32, #tpu.memory_space<vmem>>, vector<4x128xf32>
    %cst = arith.constant dense<0.000000e+00> : vector<8x128xf32>
    %2 = tpu.matmul %0, %1, %cst {dimension_numbers = #tpu.dot_dimension_numbers<[1], [0], [0], [1], [0, 0, 1, 1], [], []>} : vector<8x4xf32>, vector<4x128xf32>, vector<8x128xf32> -> vector<8x128xf32>
    %c0_3 = arith.constant 0 : index
    %c0_4 = arith.constant 0 : index
    %3 = vector.load %arg2[%c0_3, %c0_4] : memref<2x128xf32, #tpu.memory_space<vmem>>, vector<1x128xf32>
    %c1 = arith.constant 1 : index
    %c0_5 = arith.constant 0 : index
    %4 = vector.load %arg2[%c1, %c0_5] : memref<2x128xf32, #tpu.memory_space<vmem>>, vector<1x128xf32>
    %5 = vector.broadcast %3 : vector<1x128xf32> to vector<8x128xf32>
    %6 = arith.mulf %2, %5 : vector<8x128xf32>
    %7 = vector.broadcast %4 : vector<1x128xf32> to vector<8x128xf32>
    %8 = arith.addf %6, %7 : vector<8x128xf32>
    %9 = math.sin %8 : vector<8x128xf32>
    %c0_6 = arith.constant 0 : index
    %c0_7 = arith.constant 0 : index
    %10 = vector.load %arg4[%c0_6, %c0_7] : memref<8x128xf32, #tpu.memory_space<vmem>>, vector<8x128xf32>
    tpu.vector_store %arg4[%c0_6, %c0_7], %9 {strides = array<i32>} : memref<8x128xf32, #tpu.memory_space<vmem>>, vector<8x128xf32>,
    return
  }
  func.func @transform_0(%arg0: i32) -> (i32, i32) {
    %c0_i32 = arith.constant 0 : i32
    %c0_i32_0 = arith.constant 0 : i32
    return %arg0, %c0_i32 : i32, i32
  }
  func.func @transform_1(%arg0: i32) -> (i32, i32) {
    %c0_i32 = arith.constant 0 : i32
    %c0_i32_0 = arith.constant 0 : i32
    %c0_i32_1 = arith.constant 0 : i32
    return %c0_i32, %c0_i32_0 : i32, i32
  }
  func.func @transform_2(%arg0: i32) -> (i32, i32) {
    %c0_i32 = arith.constant 0 : i32
    %c0_i32_0 = arith.constant 0 : i32
    %c0_i32_1 = arith.constant 0 : i32
    return %c0_i32, %c0_i32_0 : i32, i32
  }
  func.func @transform_3(%arg0: i32) -> (i32, i32) {
    %c0_i32 = arith.constant 0 : i32
    %c0_i32_0 = arith.constant 0 : i32
    return %arg0, %c0_i32 : i32, i32
  }
}

</mosaic_0001>

<llo_original>
// kernel: tpu_custom_call.1
$region0: #{tpu_custom_call.1}
  #allocation0 [shape = 'u32[]', space=smem, size = 0x4, offset = 0x4, fixed_abs, tag = 'smem constant byte address 0x4 - core index']
  #allocation1 [shape = 'u32[72,128]{1,0:T(1,128)}', space=vmem, size = 0x9000, scoped, tag = 'internal scratch']
  %s0 = inlined_call_operand.vmem [shape: f32[8,4], index: 0, kind: input, shape index: {}]
  %s1 = inlined_call_operand.vmem [shape: f32[2,128], index: 1, kind: input, shape index: {}]
  %s2 = inlined_call_operand.vmem [shape: f32[4,128], index: 2, kind: input, shape index: {}]
  %s3 = inlined_call_operand.hbm [shape: f32[8,128], index: 3, kind: output, shape index: {}]
  %s4 = sld [smem:[#allocation0]]
  $region22: #{tpu_custom_call.1} parent=0
    _
  %s6 = ssub.s32 1, %s4
  %s7 = scalar_select 0, %s6, %s4
  $region1: #{tpu_custom_call.1} parent=0
    #allocation2 [shape = 'u8[4096]{0}', space=vmem, size = 0x1000, scoped, tag = 'output window, operand 0, single buffered']
    #allocation3 [shape = 's32[1]{0}', space=sflag, size = 0x4, scoped, tag = 'scoped memory for tpu_custom_call.1']
    %8 = vsyncpa [#allocation3], 0
    // Predicated region
    $region2: #{tpu_custom_call.1} parent=1 // pred_check
      _
    $region3: #{tpu_custom_call.1} parent=1 // pred_check_branch
      %10 = sbr.rel (0) target = $region5
    $region4: #{tpu_custom_call.1} parent=1 // pred_region
      _
    $region5: #{tpu_custom_call.1} parent=1 // pred_fallthru
      _
    // Predicated region
    $region6: #{tpu_custom_call.1} parent=1 // pred_check
      _
    $region7: #{tpu_custom_call.1} parent=1 // pred_check_branch
      %12 = sbr.rel (0) target = $region9
    $region8: #{tpu_custom_call.1} parent=1 // pred_region
      _
    $region9: #{tpu_custom_call.1} parent=1 // pred_fallthru
      _
    // Predicated region
    $region10: #{tpu_custom_call.1} parent=1 // pred_check
      _
    $region11: #{tpu_custom_call.1} parent=1 // pred_check_branch
      %14 = sbr.rel (0) target = $region13
    $region12: #{tpu_custom_call.1} parent=1 // pred_region
      _
    $region13: #{tpu_custom_call.1} parent=1 // pred_fallthru
      _
    %v15 = vld [vmem:[%s0] sm:$0xff]
    %v16 = vld [vmem:[%s2] sm:$0xf]
    %vm17 = vcmask 31744
    %v19 = vsel %vm17, %v15, 0
    %vm21 = vcmask 1043456
    %v23 = vsel %vm21, %v16, 0
    %25 = vmatpush.msra.mxu0 0.0
    %26 = vmatpush.msra.mxu0 0.0
    %27 = vmatpush.msra.mxu0 0.0
    %28 = vmatpush.msra.mxu0 0.0
    %29 = vmatpush.msra.mxu0 0.0
    %30 = vmatpush.msra.mxu0 0.0
    %31 = vmatpush.msra.mxu0 0.0
    %32 = vmatpush.msra.mxu0 0.0
    %33 = vmatpush.msra.mxu0 0.0
    %34 = vmatpush.msra.mxu0 0.0
    %35 = vmatpush.msra.mxu0 0.0
    %36 = vmatpush.msra.mxu0 0.0
    %37 = vmatpush.msra.mxu0 0.0
    %38 = vmatpush.msra.mxu0 0.0
    %39 = vmatpush.msra.mxu0 0.0
    %40 = vmatpush.msra.mxu0 %v23
    %41 = vmatmul.f32.gmra.mxu0 %v19
    %v42 = vpop.f32.mrf.mxu0
    %v43 = vadd.f32 0.0, %v42
    %44 = vdwg.mxu0
    %v45 = vld [vmem:[%s1] sm:$0x1]
    %v46 = vld [vmem:[%s1 + $0x1] sm:$0x1]
    %v47 = vperm.slane %v45, 0
    %v48 = vmul.f32 %v43, %v47
    %v49 = vperm.slane %v46, 0
    %v50 = vadd.f32 %v48, %v49
    %v51 = vand.u32 2147483647, %v50
    %vm52 = vcmp.le.f32.partialorder %v51, 0.7853982
    %vm53 = vcmp.lt.s32.totalorder %v50, 0
    %v54 = vand.u32 %v50, 2139095040
    %v55 = vshrl.u32 %v54, 23
    %v56 = vsub.s32 %v55, 127
    %v57 = vand.u32 2147483647, %v50
    %v58 = vand.u32 %v57, 8388607
    %v59 = vor.u32 %v58, 8388608
    %v60 = vsub.s32 0, %v59
    %v61 = vadd.s32 %v56, 1
    %vm62 = vcmp.gt.s32.totalorder %v61, 0
    %v63 = vsel %vm62, %v61, 0
    %v64 = vshrl.u32 %v63, 5
    %v65 = vand.u32 %v63, 31
    %v66 = vsub.s32 32, %v65
    %v67 = vshrl.u32 683565275, %v66
    %v68 = vshll.u32 683565275, %v65
    %v69 = vshrl.u32 2475754826, %v66
    %v70 = vor.u32 %v68, %v69
    %v71 = vshll.u32 2475754826, %v65
    %v72 = vshrl.u32 2131351028, %v66
    %v73 = vor.u32 %v71, %v72
    %v74 = vshll.u32 2131351028, %v65
    %v75 = vshrl.u32 2102212464, %v66
    %v76 = vor.u32 %v74, %v75
    %v77 = vshll.u32 2102212464, %v65
    %v78 = vshrl.u32 920167782, %v66
    %v79 = vor.u32 %v77, %v78
    %v80 = vshll.u32 920167782, %v65
    %v81 = vshrl.u32 1326507024, %v66
    %v82 = vor.u32 %v80, %v81
    %vm83 = vcmp.lt.s32.totalorder %v64, 1
    %vm84 = vcmp.lt.s32.totalorder %v64, 2
    %vm85 = vcmp.lt.s32.totalorder %v64, 3
    %vm86 = vcmp.lt.s32.totalorder %v64, 4
    %v87 = vsel %vm83, %v67, %v70
    %v88 = vsel %vm86, %v76, 2102212464
    %v89 = vsel %vm85, %v73, %v88
    %v90 = vsel %vm84, %v87, %v89
    %v91 = vsel %vm83, %v70, %v73
    %v92 = vsel %vm86, %v79, 920167782
    %v93 = vsel %vm85, %v76, %v92
    %v94 = vsel %vm84, %v91, %v93
    %v95 = vsel %vm83, %v73, %v76
    %v96 = vsel %vm86, %v82, 1326507024
    %v97 = vsel %vm85, %v79, %v96
    %v98 = vsel %vm84, %v95, %v97
    %v99 = vshll.u32 %v59, 8
    %v100 = vand.u32 %v99, 65535
    %v101 = vshrl.u32 %v99, 16
    %v102 = vand.u32 %v98, 65535
    %v103 = vshrl.u32 %v98, 16
    %v104 = vmul.u32 %v100, %v102
    %v105 = vmul.u32 %v100, %v103
    %v106 = vmul.u32 %v101, %v102
    %v107 = vmul.u32 %v101, %v103
    %v108 = vshll.u32 %v105, 16
    %v109 = vshrl.u32 %v105, 16
    %v110 = vshll.u32 %v106, 16
    %v111 = vshrl.u32 %v106, 16
    %vm112 = vc.u32 %v104, %v108
    %v113 = vsel %vm112, 1, 0
    %v114 = vadd.s32 %v104, %v108
    %v115 = vadd.s32 %v107, %v113
    %vm116 = vc.u32 %v114, %v110
    %v117 = vsel %vm116, 1, 0
    %v118 = vadd.s32 %v114, %v110
    %v119 = vadd.s32 %v115, %v117
    %v120 = vadd.s32 %v119, %v109
    %v121 = vadd.s32 %v120, %v111
    %v122 = vand.u32 %v99, 65535
    %v123 = vshrl.u32 %v99, 16
    %v124 = vand.u32 %v94, 65535
    %v125 = vshrl.u32 %v94, 16
    %v126 = vmul.u32 %v122, %v124
    %v127 = vmul.u32 %v122, %v125
    %v128 = vmul.u32 %v123, %v124
    %v129 = vmul.u32 %v123, %v125
    %v130 = vshll.u32 %v127, 16
    %v131 = vshrl.u32 %v127, 16
    %v132 = vshll.u32 %v128, 16
    %v133 = vshrl.u32 %v128, 16
    %vm134 = vc.u32 %v126, %v130
    %v135 = vsel %vm134, 1, 0
    %v136 = vadd.s32 %v126, %v130
    %v137 = vadd.s32 %v129, %v135
    %vm138 = vc.u32 %v136, %v132
    %v139 = vsel %vm138, 1, 0
    %v140 = vadd.s32 %v136, %v132
    %v141 = vadd.s32 %v137, %v139
    %v142 = vadd.s32 %v141, %v131
    %v143 = vadd.s32 %v142, %v133
    %v144 = vmul.u32 %v99, %v90
    %v145 = vadd.s32 %v121, %v140
    %vm146 = vc.u32 %v121, %v140
    %v147 = vadd.s32 %v143, 1
    %v148 = vsel %vm146, %v147, %v143
    %v149 = vadd.s32 %v144, %v148
    %v150 = vadd.s32 %v149, 536870912
    %v151 = vshrl.u32 %v150, 30
    %v152 = vshll.u32 %v151, 30
    %v153 = vsub.s32 %v149, %v152
    %vm154 = vcmp.lt.s32.totalorder %v153, 0
    %v155 = vsub.s32 0, %v153
    %v156 = vsel %vm154, %v155, %v153
    %v157 = vclz %v156
    %v158 = vsub.s32 %v157, 2
    %vm159 = vcmp.gt.s32.totalorder 0, %v158
    %v160 = vsel %vm159, 0, %v158
    %v161 = vsub.s32 32, %v160
    %v162 = vshll.u32 %v153, %v160
    %v163 = vshrl.u32 %v145, %v161
    %v164 = vor.u32 %v162, %v163
    %v165 = vsub.s32 4294967266, %v160
    %v166 = vadd.s32 %v165, 127
    %v167 = vshll.u32 %v166, 23
    %v168 = vor.u32 4788187, %v167
    %v169 = vand.u32 2147483647, %v168
    %v171 = vcvt.s32.f32 %v164
    %v172 = vmul.f32 %v171, %v169
    %v173 = vxor.u32 %v172, 2147483648
    %v174 = vsel %vm53, %v173, %v172
    %v175 = vsub.s32 4, %v151
    %v176 = vsel %vm53, %v175, %v151
    %v177 = vsel %vm52, %v50, %v174
    %v178 = vsel %vm52, 0, %v176
    %v179 = vmul.f32 %v177, %v177
    %v180 = vmul.f32 %v179, -0.001358992
    %v181 = vadd.f32 %v180, 0.041655596
    %v182 = vmul.f32 %v179, %v181
    %v183 = vadd.f32 %v182, -0.4999988
    %v184 = vmul.f32 %v179, %v183
    %v185 = vadd.f32 1.0, %v184
    %v186 = vmul.f32 %v177, %v177
    %v187 = vmul.f32 %v186, -0.00019511016
    %v188 = vadd.f32 %v187, 0.008332121
    %v189 = vmul.f32 %v186, %v188
    %v190 = vadd.f32 %v189, -0.16666654
    %v191 = vmul.f32 %v186, %v190
    %v192 = vadd.f32 %v191, 1.0
    %v193 = vmul.f32 %v192, %v177
    %vm194 = vweird.f32 %v50
    %v195 = vadd.s32 %v178, 3
    %v196 = vand.u32 %v195, 3
    %vm197 = vcmp.lt.s32.totalorder %v196, 2
    %vm198 = vcmp.eq.s32.totalorder %v196, 0
    %v199 = vxor.u32 %v193, 2147483648
    %v200 = vsel %vm198, %v185, %v199
    %vm201 = vcmp.eq.s32.totalorder %v196, 2
    %v202 = vxor.u32 %v185, 2147483648
    %v203 = vsel %vm201, %v202, %v193
    %v204 = vsel %vm197, %v200, %v203
    %v205 = vsel %vm194, nan, %v204
    %206 = vst [vmem:[#allocation2] sm:$0xff] %v205
    // Predicated region
    $region14: #{tpu_custom_call.1} parent=1 // pred_check
      _
    $region15: #{tpu_custom_call.1} parent=1 // pred_check_branch
      %208 = sbr.rel (0) target = $region17
    $region16: #{tpu_custom_call.1} parent=1 // pred_region
      %210 = vsyncadd [#allocation3], 0
      %s212 = sshll.u32 [#allocation2], 4
      %s213 = int_to_ptr.vmem [resolvable:$true] %s212
      %s214 = sshll.u32 %s3, 4
      %s215 = int_to_ptr.hbm [resolvable:$true] %s214
      %217 = dma.vmem_to_hbm [thread:$0]  %s213, 128, %s215, [#allocation3]
    $region17: #{tpu_custom_call.1} parent=1 // pred_fallthru
      _
    // Predicated region
    $region18: #{tpu_custom_call.1} parent=1 // pred_check
      _
    $region19: #{tpu_custom_call.1} parent=1 // pred_check_branch
      %219 = sbr.rel (0) target = $region21
    $region20: #{tpu_custom_call.1} parent=1 // pred_region
      %221 = dma.done [#allocation3], 128
    $region21: #{tpu_custom_call.1} parent=1 // pred_fallthru
      _
    %222 = vsyncpa [#allocation3], 1

</llo_original>
